<compile_context>
chip_gen: v7x
topology: tpu7x:2x2x1
jax: 0.10.0
libtpu: 0.0.40
codegen_flags: <defaults>
</compile_context>

<pallas_src>
import math

import jax
import jax.numpy as jnp
from jax.experimental import pallas as pl
from jax.experimental.pallas import tpu as pltpu

_LANES = 128


def _gt_kernel(x_ref, thr_ref, out_ref):
    """x_ref, thr_ref: (block_rows, 128) f32; out_ref: (block_rows, 128) i8."""
    out_ref[...] = (x_ref[...] > thr_ref[...]).astype(jnp.int8)


def _block_rows_for(num_classes, rows_needed, target_rows):
    """Rows per block such that (block_rows * 128) % num_classes == 0.

    That guarantee makes the flattened class pattern (flat_idx % C) identical
    inside every block, so a single (block_rows, 128) threshold slab can stay
    resident. Rows are also aligned to 32 (int8 sublane tiling).
    """
    g = math.gcd(_LANES, num_classes)
    unit = num_classes // g
    unit = unit * 32 // math.gcd(unit, 32)        # lcm(unit, 32)
    k_needed = max(1, -(-rows_needed // unit))    # ceil
    k_target = max(1, target_rows // unit)
    return unit * min(k_target, k_needed)


def attack_net_multi_threshold(x, threshold, *, target_block_rows=2048):
    """Pallas equivalent of AttackNetMultiThreshold.forward.

    x:         (B, C) float32
    threshold: (C,)   float32 parameter
    returns:   (B*C, 2) int32 one-hot of the per-element strict '>' bit.
    """
    B, C = x.shape
    N = B * C
    thr = threshold.astype(x.dtype)

    # For tiny problems a plain jnp compare+one_hot would beat the pallas_call
    # launch overhead; the kernel path is kept unconditional here so it is
    # always exercised.
    rows_needed = -(-N // _LANES)
    block_rows = _block_rows_for(C, rows_needed, target_block_rows)
    num_blocks = -(-rows_needed // block_rows)
    rows_pad = num_blocks * block_rows
    n_pad = rows_pad * _LANES

    # Lane-dense slabs: x flattened row-major (matches torch .view(-1)) and
    # zero-padded to a whole number of blocks; threshold tiled with period C.
    x_slab = jnp.pad(x.reshape(-1), (0, n_pad - N)).reshape(rows_pad, _LANES)
    block_elems = block_rows * _LANES
    thr_slab = jnp.tile(thr, block_elems // C).reshape(block_rows, _LANES)

    gt_slab = pl.pallas_call(
        _gt_kernel,
        out_shape=jax.ShapeDtypeStruct((rows_pad, _LANES), jnp.int8),
        grid=(num_blocks,),
        in_specs=[
            pl.BlockSpec((block_rows, _LANES), lambda i: (i, 0)),
            pl.BlockSpec((block_rows, _LANES), lambda i: (0, 0)),  # resident
        ],
        out_specs=pl.BlockSpec((block_rows, _LANES), lambda i: (i, 0)),
        compiler_params=pltpu.CompilerParams(
            dimension_semantics=("parallel",),
            vmem_limit_bytes=32 * 1024 * 1024,
        ),
    )(x_slab, thr_slab)

    # Drop padding, widen once, and build the (N, 2) one-hot in fused XLA ops.
    gt = gt_slab.reshape(-1)[:N].astype(jnp.int32)
    return jnp.stack([1 - gt, gt], axis=-1)


def _reference(x, threshold):
    gt = (x > threshold[None, :]).reshape(-1).astype(jnp.int32)
    return jax.nn.one_hot(gt, 2, dtype=jnp.int32)


if __name__ == "__main__":
    num_classes = 10
    batch = 2

    key = jax.random.PRNGKey(0)
    kx, kt = jax.random.split(key)

    x = jax.random.normal(kx, (batch, num_classes), dtype=jnp.float32)
    # Parameter default is zeros; use small random values so both one-hot
    # branches are exercised.
    threshold = 0.1 * jax.random.normal(kt, (num_classes,), dtype=jnp.float32)

    out = attack_net_multi_threshold(x, threshold)
    out = jax.block_until_ready(out)
    assert out.shape == (batch * num_classes, 2), out.shape
    assert jnp.array_equal(out, _reference(x, threshold)), "mismatch (small)"

    # Second check: force a multi-block grid (exercises tiling / pipelining).
    x_big = jax.random.normal(kx, (4096, num_classes), dtype=jnp.float32)
    out_big = jax.block_until_ready(
        attack_net_multi_threshold(x_big, threshold, target_block_rows=160)
    )
    assert jnp.array_equal(out_big, _reference(x_big, threshold)), "mismatch (tiled)"

    print("KERNEL_OK")
</pallas_src>

<mosaic_0001>
module attributes {stable_mosaic.version = 11 : i64} {
  func.func @_gt_kernel(%arg0: i32, %arg1: memref<160x128xf32, #tpu.memory_space<vmem>>, %arg2: memref<160x128xf32, #tpu.memory_space<vmem>>, %arg3: memref<160x128xi8, #tpu.memory_space<vmem>>) attributes {dimension_semantics = [#tpu.dimension_semantics<parallel>], iteration_bounds = array<i64: 1>, scalar_prefetch = 0 : i64, scratch_operands = 0 : i64, tpu.core_type = #tpu.core_type<tc>, window_params = [{transform_indices = @transform_0, window_bounds = array<i64: 160, 128>}, {pipeline_mode = #tpu.pipeline_mode<synchronous>, transform_indices = @transform_1, window_bounds = array<i64: 160, 128>}, {transform_indices = @transform_2, window_bounds = array<i64: 160, 128>}]} {
    %c0 = arith.constant 0 : index
    %c0_0 = arith.constant 0 : index
    %0 = vector.load %arg1[%c0, %c0_0] : memref<160x128xf32, #tpu.memory_space<vmem>>, vector<160x128xf32>
    %c0_1 = arith.constant 0 : index
    %c0_2 = arith.constant 0 : index
    %1 = vector.load %arg2[%c0_1, %c0_2] : memref<160x128xf32, #tpu.memory_space<vmem>>, vector<160x128xf32>
    %2 = arith.cmpf ogt, %0, %1 : vector<160x128xf32>
    %3 = arith.extui %2 : vector<160x128xi1> to vector<160x128xi8>
    %c0_3 = arith.constant 0 : index
    %c0_4 = arith.constant 0 : index
    %4 = vector.load %arg3[%c0_3, %c0_4] : memref<160x128xi8, #tpu.memory_space<vmem>>, vector<160x128xi8>
    tpu.vector_store %arg3[%c0_3, %c0_4], %3 {strides = array<i32>} : memref<160x128xi8, #tpu.memory_space<vmem>>, vector<160x128xi8>,
    return
  }
  func.func @transform_0(%arg0: i32) -> (i32, i32) {
    %c0_i32 = arith.constant 0 : i32
    %c0_i32_0 = arith.constant 0 : i32
    return %arg0, %c0_i32 : i32, i32
  }
  func.func @transform_1(%arg0: i32) -> (i32, i32) {
    %c0_i32 = arith.constant 0 : i32
    %c0_i32_0 = arith.constant 0 : i32
    %c0_i32_1 = arith.constant 0 : i32
    return %c0_i32, %c0_i32_0 : i32, i32
  }
  func.func @transform_2(%arg0: i32) -> (i32, i32) {
    %c0_i32 = arith.constant 0 : i32
    %c0_i32_0 = arith.constant 0 : i32
    return %arg0, %c0_i32 : i32, i32
  }
}

</mosaic_0001>

<llo_original>
// kernel: tpu_custom_call.1
$region0: #{tpu_custom_call.1}
  #allocation0 [shape = 'u32[]', space=smem, size = 0x4, offset = 0x4, fixed_abs, tag = 'smem constant byte address 0x4 - core index']
  #allocation1 [shape = 'u32[144,128]{1,0:T(1,128)}', space=vmem, size = 0x12000, scoped, tag = 'internal scratch']
  %s0 = inlined_call_operand.hbm [shape: f32[160,128], index: 0, kind: input, shape index: {}]
  %s1 = inlined_call_operand.hbm [shape: f32[160,128], index: 1, kind: input, shape index: {}]
  %s2 = inlined_call_operand.hbm [shape: s8[160,128], index: 2, kind: output, shape index: {}]
  %s3 = sld [smem:[#allocation0]]
  $region26: #{tpu_custom_call.1} parent=0
    _
  %s5 = ssub.s32 1, %s3
  %s6 = scalar_select 0, %s5, %s3
  $region1: #{tpu_custom_call.1} parent=0
    #allocation2 [shape = 'u8[81920]{0}', space=vmem, size = 0x14000, scoped, tag = 'input window, operand 0, single buffered']
    #allocation3 [shape = 's32[1]{0}', space=sflag, size = 0x4, scoped, tag = 'scoped memory for tpu_custom_call.1']
    #allocation4 [shape = 's32[1]{0}', space=sflag, size = 0x4, scoped, tag = 'scoped memory for tpu_custom_call.1']
    #allocation5 [shape = 'u8[81920]{0}', space=vmem, size = 0x14000, scoped, tag = 'input window, operand 1, single buffered']
    #allocation6 [shape = 's32[1]{0}', space=sflag, size = 0x4, scoped, tag = 'scoped memory for tpu_custom_call.1']
    #allocation7 [shape = 'u8[20480]{0}', space=vmem, size = 0x5000, scoped, tag = 'output window, operand 0, single buffered']
    %7 = vsyncpa [#allocation3], 0
    %8 = vsyncpa [#allocation6], 0
    %9 = vsyncpa [#allocation4], 0
    // Predicated region
    $region2: #{tpu_custom_call.1} parent=1 // pred_check
      _
    $region3: #{tpu_custom_call.1} parent=1 // pred_check_branch
      %11 = sbr.rel (0) target = $region5
    $region4: #{tpu_custom_call.1} parent=1 // pred_region
      %s13 = ssub.s32 2560, 2560
      %14 = vsyncadd [#allocation3], %s13
      %s15 = sshll.u32 [#allocation2], 4
      %s16 = int_to_ptr.vmem [resolvable:$true] %s15
      %21 = dma.hbm_to_vmem [thread:$0]  %s0, 2560, %s16, [#allocation3], 128, 128, 8
    $region5: #{tpu_custom_call.1} parent=1 // pred_fallthru
      _
    // Predicated region
    $region6: #{tpu_custom_call.1} parent=1 // pred_check
      _
    $region7: #{tpu_custom_call.1} parent=1 // pred_check_branch
      %23 = sbr.rel (0) target = $region9
    $region8: #{tpu_custom_call.1} parent=1 // pred_region
      %s25 = ssub.s32 2560, 2560
      %26 = vsyncadd [#allocation6], %s25
      %s27 = sshll.u32 [#allocation5], 4
      %s28 = int_to_ptr.vmem [resolvable:$true] %s27
      %33 = dma.hbm_to_vmem [thread:$0]  %s1, 2560, %s28, [#allocation6], 128, 128, 8
    $region9: #{tpu_custom_call.1} parent=1 // pred_fallthru
      _
    // Predicated region
    $region10: #{tpu_custom_call.1} parent=1 // pred_check
      _
    $region11: #{tpu_custom_call.1} parent=1 // pred_check_branch
      %35 = sbr.rel (0) target = $region13
    $region12: #{tpu_custom_call.1} parent=1 // pred_region
      %36 = dma.done [#allocation3], 2560
    $region13: #{tpu_custom_call.1} parent=1 // pred_fallthru
      _
    // Predicated region
    $region14: #{tpu_custom_call.1} parent=1 // pred_check
      _
    $region15: #{tpu_custom_call.1} parent=1 // pred_check_branch
      %38 = sbr.rel (0) target = $region17
    $region16: #{tpu_custom_call.1} parent=1 // pred_region
      %39 = dma.done [#allocation6], 2560
    $region17: #{tpu_custom_call.1} parent=1 // pred_fallthru
      _
    %v42 = vld [vmem:[#allocation2] sm:$0xff]
    %v43 = vld [vmem:[#allocation2 + $0x8] sm:$0xff]
    %v44 = vld [vmem:[#allocation2 + $0x10] sm:$0xff]
    %v45 = vld [vmem:[#allocation2 + $0x18] sm:$0xff]
    %v46 = vld [vmem:[#allocation2 + $0x20] sm:$0xff]
    %v47 = vld [vmem:[#allocation2 + $0x28] sm:$0xff]
    %v48 = vld [vmem:[#allocation2 + $0x30] sm:$0xff]
    %v49 = vld [vmem:[#allocation2 + $0x38] sm:$0xff]
    %v50 = vld [vmem:[#allocation2 + $0x40] sm:$0xff]
    %v51 = vld [vmem:[#allocation2 + $0x48] sm:$0xff]
    %v52 = vld [vmem:[#allocation2 + $0x50] sm:$0xff]
    %v53 = vld [vmem:[#allocation2 + $0x58] sm:$0xff]
    %v54 = vld [vmem:[#allocation2 + $0x60] sm:$0xff]
    %v55 = vld [vmem:[#allocation2 + $0x68] sm:$0xff]
    %v56 = vld [vmem:[#allocation2 + $0x70] sm:$0xff]
    %v57 = vld [vmem:[#allocation2 + $0x78] sm:$0xff]
    %v58 = vld [vmem:[#allocation2 + $0x80] sm:$0xff]
    %v59 = vld [vmem:[#allocation2 + $0x88] sm:$0xff]
    %v60 = vld [vmem:[#allocation2 + $0x90] sm:$0xff]
    %v61 = vld [vmem:[#allocation2 + $0x98] sm:$0xff]
    %v62 = vld [vmem:[#allocation5] sm:$0xff]
    %v63 = vld [vmem:[#allocation5 + $0x8] sm:$0xff]
    %v64 = vld [vmem:[#allocation5 + $0x10] sm:$0xff]
    %v65 = vld [vmem:[#allocation5 + $0x18] sm:$0xff]
    %v66 = vld [vmem:[#allocation5 + $0x20] sm:$0xff]
    %v67 = vld [vmem:[#allocation5 + $0x28] sm:$0xff]
    %v68 = vld [vmem:[#allocation5 + $0x30] sm:$0xff]
    %v69 = vld [vmem:[#allocation5 + $0x38] sm:$0xff]
    %v70 = vld [vmem:[#allocation5 + $0x40] sm:$0xff]
    %v71 = vld [vmem:[#allocation5 + $0x48] sm:$0xff]
    %v72 = vld [vmem:[#allocation5 + $0x50] sm:$0xff]
    %v73 = vld [vmem:[#allocation5 + $0x58] sm:$0xff]
    %v74 = vld [vmem:[#allocation5 + $0x60] sm:$0xff]
    %v75 = vld [vmem:[#allocation5 + $0x68] sm:$0xff]
    %v76 = vld [vmem:[#allocation5 + $0x70] sm:$0xff]
    %v77 = vld [vmem:[#allocation5 + $0x78] sm:$0xff]
    %v78 = vld [vmem:[#allocation5 + $0x80] sm:$0xff]
    %v79 = vld [vmem:[#allocation5 + $0x88] sm:$0xff]
    %v80 = vld [vmem:[#allocation5 + $0x90] sm:$0xff]
    %v81 = vld [vmem:[#allocation5 + $0x98] sm:$0xff]
    %vm82 = vcmp.gt.f32.partialorder %v42, %v62
    %vm83 = vcmp.gt.f32.partialorder %v43, %v63
    %vm84 = vcmp.gt.f32.partialorder %v44, %v64
    %vm85 = vcmp.gt.f32.partialorder %v45, %v65
    %vm86 = vcmp.gt.f32.partialorder %v46, %v66
    %vm87 = vcmp.gt.f32.partialorder %v47, %v67
    %vm88 = vcmp.gt.f32.partialorder %v48, %v68
    %vm89 = vcmp.gt.f32.partialorder %v49, %v69
    %vm90 = vcmp.gt.f32.partialorder %v50, %v70
    %vm91 = vcmp.gt.f32.partialorder %v51, %v71
    %vm92 = vcmp.gt.f32.partialorder %v52, %v72
    %vm93 = vcmp.gt.f32.partialorder %v53, %v73
    %vm94 = vcmp.gt.f32.partialorder %v54, %v74
    %vm95 = vcmp.gt.f32.partialorder %v55, %v75
    %vm96 = vcmp.gt.f32.partialorder %v56, %v76
    %vm97 = vcmp.gt.f32.partialorder %v57, %v77
    %vm98 = vcmp.gt.f32.partialorder %v58, %v78
    %vm99 = vcmp.gt.f32.partialorder %v59, %v79
    %vm100 = vcmp.gt.f32.partialorder %v60, %v80
    %vm101 = vcmp.gt.f32.partialorder %v61, %v81
    %vm102 = vmpackc.low %vm83, %vm82
    %vm103 = vmpackc.low %vm85, %vm84
    %vm104 = vmpackc.even %vm103, %vm102
    %vm105 = vmpackc.low %vm87, %vm86
    %vm106 = vmpackc.low %vm89, %vm88
    %vm107 = vmpackc.even %vm106, %vm105
    %vm108 = vmpackc.low %vm91, %vm90
    %vm109 = vmpackc.low %vm93, %vm92
    %vm110 = vmpackc.even %vm109, %vm108
    %vm111 = vmpackc.low %vm95, %vm94
    %vm112 = vmpackc.low %vm97, %vm96
    %vm113 = vmpackc.even %vm112, %vm111
    %vm114 = vmpackc.low %vm99, %vm98
    %vm115 = vmpackc.low %vm101, %vm100
    %vm116 = vmpackc.even %vm115, %vm114
    %v117 = vsel %vm104, 16843009, 0
    %v118 = vsel %vm107, 16843009, 0
    %v119 = vsel %vm110, 16843009, 0
    %v120 = vsel %vm113, 16843009, 0
    %v121 = vsel %vm116, 16843009, 0
    %122 = vst [vmem:[#allocation7] sm:$0xff] %v117
    %123 = vst [vmem:[#allocation7 + $0x8] sm:$0xff] %v118
    %124 = vst [vmem:[#allocation7 + $0x10] sm:$0xff] %v119
    %125 = vst [vmem:[#allocation7 + $0x18] sm:$0xff] %v120
    %126 = vst [vmem:[#allocation7 + $0x20] sm:$0xff] %v121
    // Predicated region
    $region18: #{tpu_custom_call.1} parent=1 // pred_check
      _
    $region19: #{tpu_custom_call.1} parent=1 // pred_check_branch
      %128 = sbr.rel (0) target = $region21
    $region20: #{tpu_custom_call.1} parent=1 // pred_region
      %s130 = ssub.s32 640, 640
      %131 = vsyncadd [#allocation4], %s130
      %s132 = sshll.u32 [#allocation7], 4
      %s133 = int_to_ptr.vmem [resolvable:$true] %s132
      %138 = dma.vmem_to_hbm [thread:$0]  %s133, 640, %s2, [#allocation4], 128, 128, 8
    $region21: #{tpu_custom_call.1} parent=1 // pred_fallthru
      _
    // Predicated region
    $region22: #{tpu_custom_call.1} parent=1 // pred_check
      _
    $region23: #{tpu_custom_call.1} parent=1 // pred_check_branch
      %140 = sbr.rel (0) target = $region25
    $region24: #{tpu_custom_call.1} parent=1 // pred_region
      %141 = dma.done [#allocation4], 640
    $region25: #{tpu_custom_call.1} parent=1 // pred_fallthru
      _
    %142 = vsyncpa [#allocation3], 1
    %143 = vsyncpa [#allocation6], 1
    %144 = vsyncpa [#allocation4], 1

</llo_original>
